<compile_context>
chip_gen: v7x
topology: tpu7x:2x2x1
jax: 0.10.0
libtpu: 0.0.40
codegen_flags: <defaults>
</compile_context>

<pallas_src>
import functools

import jax
import jax.numpy as jnp
from jax import lax
from jax.experimental import pallas as pl
from jax.experimental.pallas import tpu as pltpu


def _round_up(x, m):
    return ((x + m - 1) // m) * m


def _choose_tile_n(n, c, itemsize):
    """Rows per tile: multiple of 16, capped so a double-buffered logits tile
    (~2 x TILE_N x C x itemsize) stays well inside v7x's 64 MiB VMEM."""
    budget = 6 * 1024 * 1024                         # per input buffer
    cap = max(16, (budget // max(1, c * itemsize)) // 16 * 16)
    return max(16, min(2048, cap, _round_up(n, 16)))


def _focal_loss_tile_kernel(logits_ref, targets_ref, alpha_ref, out_ref, *,
                            gamma, use_alpha, n_total, tile_n, scalar_output):
    # Cast to f32 in-register (inputs may be bf16/f16 in HBM).
    logits = logits_ref[...].astype(jnp.float32)          # (TILE_N, C)
    tgt = targets_ref[...]                                 # (TILE_N, 1) int32
    c = logits.shape[-1]

    # One-hot of the targets via a lane-axis iota (XLU/VPU filler work;
    # the kernel is HBM-bound, so this is effectively free).
    col = lax.broadcasted_iota(jnp.int32, (tile_n, c), 1)
    onehot = (col == tgt).astype(jnp.float32)              # (TILE_N, C)

    # Stable cross-entropy: ce = logsumexp(logits) - logits[target]
    m = jnp.max(logits, axis=-1, keepdims=True)            # (TILE_N, 1)
    lse = m + jnp.log(jnp.sum(jnp.exp(logits - m), axis=-1, keepdims=True))
    logit_t = jnp.sum(logits * onehot, axis=-1, keepdims=True)
    ce = lse - logit_t                                      # (TILE_N, 1)

    pt = jnp.exp(-ce)
    # pt can round to slightly > 1 when ce ~ 0; clamp so fractional gamma
    # cannot hit pow(negative, frac) -> NaN.
    one_minus_pt = jnp.maximum(1.0 - pt, 0.0)
    if isinstance(gamma, int):
        # integer_pow lowers to VPU multiplies (gamma==2 -> x*x), keeping the
        # single EUP slot free for the exp()s above.
        w = one_minus_pt ** gamma
    else:
        w = one_minus_pt ** jnp.float32(gamma)
    focal = w * ce                                          # (TILE_N, 1)

    if use_alpha:
        alpha = alpha_ref[...].astype(jnp.float32)          # (1, C)
        alpha_t = jnp.sum(alpha * onehot, axis=-1, keepdims=True)
        focal = alpha_t * focal

    # Mask rows beyond the true batch size (ragged last tile).
    row = lax.broadcasted_iota(jnp.int32, (tile_n, 1), 0) + \
        pl.program_id(0) * tile_n
    focal = jnp.where(row < n_total, focal, 0.0)

    if scalar_output:
        # Per-block partial sum, written as a full aligned (1, 8, 128) tile
        # (unmasked stores); the wrapper reads [:, 0, 0] and finishes the
        # reduction.  Independent per-block outputs -> "parallel" grid axis.
        block_sum = jnp.sum(focal)
        out_ref[...] = jnpp_broadcast(block_sum, out_ref.shape)
    else:
        # TODO(synk): a lane-dense (1, TILE_N) 'none' output would need an
        # in-kernel sublane->lane relayout; kept as (TILE_N, 1) since this
        # store is <= 1/C of the logits read traffic.
        out_ref[...] = focal


def jnp_broadcast(x, shape):
    return jnp.broadcast_to(x, shape).astype(jnp.float32)


# keep the name used inside the kernel
jnp_p_broadcast = jnp_broadcast
jnp__broadcast = jnp_broadcast
jnp_broadcast_to = jnp_broadcast
jnp_p = None
jnp_broadcast_fn = jnp_broadcast
jnp_pb = jnp_broadcast
jnp_bc = jnp_broadcast
jnp_bcast = jnp_broadcast
jnp_splat = jnp_broadcast
jnp_fill = jnp_broadcast
jnp_full_splat = jnp_broadcast
jnp_scalar_tile = jnp_broadcast
jnp_p_broadcast_to = jnp_broadcast
jnp_p_bcast = jnp_broadcast
jnp_p_splat = jnp_broadcast
jnp_p_fill = jnp_broadcast
jnp_p_tile = jnp_broadcast
jnp_p_full = jnp_broadcast
jnp_p_b = jnp_broadcast
jnpp_broadcast = jnp_broadcast


def balanced_focal_loss(inputs, targets, alpha=None, gamma=2, reduction="mean"):
    """JAX/Pallas equivalent of BalancedFocalLoss.forward.

    inputs:  (N, C) float logits (f32 / bf16 / f16 -- fed to the kernel as-is)
    targets: (N,)   int class indices
    alpha:   optional (C,) per-class weights
    """
    inputs = jnp.asarray(inputs)
    n, c = inputs.shape
    itemsize = jnp.dtype(inputs.dtype).itemsize

    use_alpha = alpha is not None
    alpha_arr = (jnp.asarray(alpha, jnp.float32).reshape(1, c) if use_alpha
                 else jnp.ones((1, c), jnp.float32))
    tgt2 = jnp.asarray(targets, jnp.int32).reshape(n, 1)

    tile_n = _choose_tile_n(n, c, itemsize)
    num_blocks = pl.cdiv(n, tile_n)
    grid = (num_blocks,)

    scalar_output = reduction in ("mean", "sum")

    kernel = functools.partial(
        _focal_loss_tile_kernel, gamma=gamma, use_alpha=use_alpha,
        n_total=n, tile_n=tile_n, scalar_output=scalar_output)

    in_specs = [
        pl.BlockSpec((tile_n, c), lambda i: (i, 0)),   # logits
        pl.BlockSpec((tile_n, 1), lambda i: (i, 0)),   # targets
        pl.BlockSpec((1, c), lambda i: (0, 0)),        # alpha (broadcast)
    ]

    if scalar_output:
        out_shape = jax.ShapeDtypeStruct((num_blocks, 8, 128), jnp.float32)
        out_specs = pl.BlockSpec((1, 8, 128), lambda i: (i, 0, 0))
        out_bytes = num_blocks * 8 * 128 * 4
    else:
        out_shape = jax.ShapeDtypeStruct((n, 1), jnp.float32)
        out_specs = pl.BlockSpec((tile_n, 1), lambda i: (i, 0))
        out_bytes = n * 4

    cost = pl.CostEstimate(
        flops=10 * n * c,
        transcendentals=n * c + 3 * n,
        bytes_accessed=n * c * itemsize + n * 4 + c * 4 + out_bytes,
    )

    out = pl.pallas_call(
        kernel,
        out_shape=out_shape,
        grid_spec=pltpu.PrefetchScalarGridSpec(
            num_scalar_prefetch=0,
            grid=grid,
            in_specs=in_specs,
            out_specs=out_specs,
        ),
        compiler_params=pltpu.CompilerParams(
            dimension_semantics=("parallel",),
            vmem_limit_bytes=32 * 1024 * 1024,
        ),
        cost_estimate=cost,
    )(inputs, tgt2, alpha_arr)

    if reduction == "mean":
        return jnp.sum(out[:, 0, 0]) / jnp.float32(n)
    if reduction == "sum":
        return jnp.sum(out[:, 0, 0])
    return out[:, 0]


def _reference(inputs, targets, alpha, gamma, reduction):
    """Pure-JAX reference mirroring the PyTorch forward."""
    logits = jnp.asarray(inputs).astype(jnp.float32)
    lse = jax.scipy.special.logsumexp(logits, axis=-1)
    logit_t = jnp.take_along_axis(logits, targets[:, None], axis=-1)[:, 0]
    ce = lse - logit_t
    pt = jnp.exp(-ce)
    focal = (1.0 - pt) ** gamma * ce
    if alpha is not None:
        focal = alpha[targets] * focal
    if reduction == "mean":
        return focal.mean()
    if reduction == "sum":
        return focal.sum()
    return focal


if __name__ == "__main__":
    key = jax.random.PRNGKey(0)
    k1, k2, k3, k4 = jax.random.split(key, 4)

    C = 16
    alpha = 0.25 + 0.05 * jnp.arange(C, dtype=jnp.float32)
    gamma = 2

    # 1) ragged batch, alpha, mean (f32)
    N1 = 37
    logits1 = jax.random.normal(k1, (N1, C), jnp.float32) * 2.0
    tgts1 = jax.random.randint(k2, (N1,), 0, C, jnp.int32)
    got = jax.block_until_ready(
        balanced_focal_loss(logits1, tgts1, alpha=alpha, gamma=gamma,
                            reduction="mean"))
    ref = _reference(logits1, tgts1, alpha, gamma, "mean")
    assert jnp.allclose(got, ref, rtol=1e-5, atol=1e-5), (got, ref)

    # 2) no alpha, sum (f32)
    N2 = 64
    logits2 = jax.random.normal(k3, (N2, C), jnp.float32) * 2.0
    tgts2 = jax.random.randint(k4, (N2,), 0, C, jnp.int32)
    got = jax.block_until_ready(
        balanced_focal_loss(logits2, tgts2, alpha=None, gamma=gamma,
                            reduction="sum"))
    ref = _reference(logits2, tgts2, None, gamma, "sum")
    assert jnp.allclose(got, ref, rtol=1e-5, atol=1e-5), (got, ref)

    # 3) per-sample ('none') reduction (f32)
    N3 = 24
    logits3 = logits2[:N3]
    tgts3 = tgts2[:N3]
    got = jax.block_until_ready(
        balanced_focal_loss(logits3, tgts3, alpha=alpha, gamma=gamma,
                            reduction="none"))
    ref = _reference(logits3, tgts3, alpha, gamma, "none")
    assert got.shape == (N3,)
    assert jnp.allclose(got, ref, rtol=1e-5, atol=1e-5), (got, ref)

    # 4) bf16 logits fed straight to the kernel (cast to f32 in-register)
    logits_bf16 = logits1.astype(jnp.bfloat16)
    got = jax.block_until_ready(
        balanced_focal_loss(logits_bf16, tgts1, alpha=alpha, gamma=gamma,
                            reduction="mean"))
    ref = _reference(logits_bf16, tgts1, alpha, gamma, "mean")
    assert jnp.allclose(got, ref, rtol=1e-4, atol=1e-4), (got, ref)

    print("KERNEL_OK")
</pallas_src>

<mosaic_0001>
module attributes {stable_mosaic.version = 11 : i64} {
  func.func @_focal_loss_tile_kernel(%arg0: i32, %arg1: memref<48x16xf32, #tpu.memory_space<vmem>>, %arg2: memref<48x1xi32, #tpu.memory_space<vmem>>, %arg3: memref<1x16xf32, #tpu.memory_space<vmem>>, %arg4: memref<1x8x128xf32, #tpu.memory_space<vmem>>) attributes {dimension_semantics = [#tpu.dimension_semantics<parallel>], iteration_bounds = array<i64: 1>, scalar_prefetch = 0 : i64, scratch_operands = 0 : i64, tpu.core_type = #tpu.core_type<tc>, window_params = [{transform_indices = @transform_0, window_bounds = array<i64: 48, 16>}, {transform_indices = @transform_1, window_bounds = array<i64: 48, 1>}, {pipeline_mode = #tpu.pipeline_mode<synchronous>, transform_indices = @transform_2, window_bounds = array<i64: 1, 16>}, {transform_indices = @transform_3, window_bounds = array<i64: 1, 8, 128>}]} {
    %c0 = arith.constant 0 : index
    %c0_0 = arith.constant 0 : index
    %0 = vector.load %arg1[%c0, %c0_0] : memref<48x16xf32, #tpu.memory_space<vmem>>, vector<48x16xf32>
    %c0_1 = arith.constant 0 : index
    %c0_2 = arith.constant 0 : index
    %1 = vector.load %arg2[%c0_1, %c0_2] : memref<48x1xi32, #tpu.memory_space<vmem>>, vector<48x1xi32>
    %2 = tpu.iota {dimensions = array<i32: 1>} : vector<48x16xi32>
    %3 = vector.broadcast %1 : vector<48x1xi32> to vector<48x16xi32>
    %4 = arith.cmpi eq, %2, %3 : vector<48x16xi32>
    %5 = arith.extui %4 : vector<48x16xi1> to vector<48x16xi32>
    %6 = arith.sitofp %5 : vector<48x16xi32> to vector<48x16xf32>
    %cst = arith.constant dense<0xFF800000> : vector<48xf32>
    %7 = vector.multi_reduction <maximumf>, %0, %cst [1] : vector<48x16xf32> to vector<48xf32>
    %8 = vector.shape_cast %7 : vector<48xf32> to vector<48x1xf32>
    %9 = vector.broadcast %8 : vector<48x1xf32> to vector<48x16xf32>
    %10 = arith.subf %0, %9 : vector<48x16xf32>
    %11 = math.exp %10 : vector<48x16xf32>
    %cst_3 = arith.constant dense<0.000000e+00> : vector<48xf32>
    %12 = vector.multi_reduction <add>, %11, %cst_3 [1] : vector<48x16xf32> to vector<48xf32>
    %13 = vector.shape_cast %12 : vector<48xf32> to vector<48x1xf32>
    %14 = math.log %13 : vector<48x1xf32>
    %15 = arith.addf %8, %14 : vector<48x1xf32>
    %16 = arith.mulf %0, %6 : vector<48x16xf32>
    %cst_4 = arith.constant dense<0.000000e+00> : vector<48xf32>
    %17 = vector.multi_reduction <add>, %16, %cst_4 [1] : vector<48x16xf32> to vector<48xf32>
    %18 = vector.shape_cast %17 : vector<48xf32> to vector<48x1xf32>
    %19 = arith.subf %15, %18 : vector<48x1xf32>
    %cst_5 = arith.constant 0.000000e+00 : f32
    %20 = vector.broadcast %cst_5 : f32 to vector<48x1xf32>
    %21 = arith.subf %20, %19 : vector<48x1xf32>
    %22 = math.exp %21 : vector<48x1xf32>
    %cst_6 = arith.constant 1.000000e+00 : f32
    %23 = vector.broadcast %cst_6 : f32 to vector<48x1xf32>
    %24 = arith.subf %23, %22 : vector<48x1xf32>
    %cst_7 = arith.constant 0.000000e+00 : f32
    %25 = vector.broadcast %cst_7 : f32 to vector<48x1xf32>
    %26 = arith.maximumf %24, %25 : vector<48x1xf32>
    %27 = arith.mulf %26, %26 : vector<48x1xf32>
    %28 = arith.mulf %27, %19 : vector<48x1xf32>
    %c0_8 = arith.constant 0 : index
    %c0_9 = arith.constant 0 : index
    %29 = vector.load %arg3[%c0_8, %c0_9] : memref<1x16xf32, #tpu.memory_space<vmem>>, vector<1x16xf32>
    %30 = vector.broadcast %29 : vector<1x16xf32> to vector<48x16xf32>
    %31 = arith.mulf %30, %6 : vector<48x16xf32>
    %cst_10 = arith.constant dense<0.000000e+00> : vector<48xf32>
    %32 = vector.multi_reduction <add>, %31, %cst_10 [1] : vector<48x16xf32> to vector<48xf32>
    %33 = vector.shape_cast %32 : vector<48xf32> to vector<48x1xf32>
    %34 = arith.mulf %33, %28 : vector<48x1xf32>
    %35 = tpu.iota {dimensions = array<i32: 0>} : vector<48x1xi32>
    %c48_i32 = arith.constant 48 : i32
    %36 = arith.muli %arg0, %c48_i32 : i32
    %37 = vector.broadcast %36 : i32 to vector<48x1xi32>
    %38 = arith.addi %35, %37 : vector<48x1xi32>
    %c37_i32 = arith.constant 37 : i32
    %39 = vector.broadcast %c37_i32 : i32 to vector<48x1xi32>
    %40 = arith.cmpi slt, %38, %39 : vector<48x1xi32>
    %cst_11 = arith.constant 0.000000e+00 : f32
    %41 = vector.broadcast %cst_11 : f32 to vector<48x1xf32>
    %42 = arith.select %40, %34, %41 : vector<48x1xi1>, vector<48x1xf32>
    %43 = vector.shape_cast %42 : vector<48x1xf32> to vector<1x48x1xf32>
    %cst_12 = arith.constant dense<0.000000e+00> : vector<1xf32>
    %44 = vector.multi_reduction <add>, %43, %cst_12 [1, 2] : vector<1x48x1xf32> to vector<1xf32>
    %45 = vector.shape_cast %44 : vector<1xf32> to vector<1x1x1xf32>
    %46 = vector.extract %45[0, 0, 0] : f32 from vector<1x1x1xf32>
    %47 = vector.broadcast %46 : f32 to vector<1x8x128xf32>
    %c0_13 = arith.constant 0 : index
    %c0_14 = arith.constant 0 : index
    %c0_15 = arith.constant 0 : index
    %48 = vector.load %arg4[%c0_13, %c0_14, %c0_15] : memref<1x8x128xf32, #tpu.memory_space<vmem>>, vector<1x8x128xf32>
    tpu.vector_store %arg4[%c0_13, %c0_14, %c0_15], %47 {strides = array<i32>} : memref<1x8x128xf32, #tpu.memory_space<vmem>>, vector<1x8x128xf32>,
    return
  }
  func.func @transform_0(%arg0: i32) -> (i32, i32) {
    %c0_i32 = arith.constant 0 : i32
    %c0_i32_0 = arith.constant 0 : i32
    return %arg0, %c0_i32 : i32, i32
  }
  func.func @transform_1(%arg0: i32) -> (i32, i32) {
    %c0_i32 = arith.constant 0 : i32
    %c0_i32_0 = arith.constant 0 : i32
    return %arg0, %c0_i32 : i32, i32
  }
  func.func @transform_2(%arg0: i32) -> (i32, i32) {
    %c0_i32 = arith.constant 0 : i32
    %c0_i32_0 = arith.constant 0 : i32
    %c0_i32_1 = arith.constant 0 : i32
    return %c0_i32, %c0_i32_0 : i32, i32
  }
  func.func @transform_3(%arg0: i32) -> (i32, i32, i32) {
    %c0_i32 = arith.constant 0 : i32
    %c0_i32_0 = arith.constant 0 : i32
    %c0_i32_1 = arith.constant 0 : i32
    return %arg0, %c0_i32, %c0_i32_0 : i32, i32, i32
  }
}

</mosaic_0001>

<llo_original>
// kernel: tpu_custom_call.1
$region0: #{tpu_custom_call.1}
  #allocation0 [shape = 'u32[]', space=smem, size = 0x4, offset = 0x4, fixed_abs, tag = 'smem constant byte address 0x4 - core index']
  #allocation1 [shape = 'u32[144,128]{1,0:T(1,128)}', space=vmem, size = 0x12000, scoped, tag = 'internal scratch']
  %s0 = inlined_call_operand.vmem [shape: f32[37,16], index: 0, kind: input, shape index: {}]
  %s1 = inlined_call_operand.vmem [shape: s32[37,1], index: 1, kind: input, shape index: {}]
  %s2 = inlined_call_operand.vmem [shape: f32[1,16], index: 2, kind: input, shape index: {}]
  %s3 = inlined_call_operand.hbm [shape: f32[1,8,128], index: 3, kind: output, shape index: {}]
  %s4 = sld [smem:[#allocation0]]
  $region22: #{tpu_custom_call.1} parent=0
    _
  %s6 = ssub.s32 1, %s4
  %s7 = scalar_select 0, %s6, %s4
  $region1: #{tpu_custom_call.1} parent=0
    #allocation2 [shape = 'u8[4096]{0}', space=vmem, size = 0x1000, scoped, tag = 'output window, operand 0, single buffered']
    #allocation3 [shape = 's32[1]{0}', space=sflag, size = 0x4, scoped, tag = 'scoped memory for tpu_custom_call.1']
    %8 = vsyncpa [#allocation3], 0
    // Predicated region
    $region2: #{tpu_custom_call.1} parent=1 // pred_check
      _
    $region3: #{tpu_custom_call.1} parent=1 // pred_check_branch
      %10 = sbr.rel (0) target = $region5
    $region4: #{tpu_custom_call.1} parent=1 // pred_region
      _
    $region5: #{tpu_custom_call.1} parent=1 // pred_fallthru
      _
    // Predicated region
    $region6: #{tpu_custom_call.1} parent=1 // pred_check
      _
    $region7: #{tpu_custom_call.1} parent=1 // pred_check_branch
      %12 = sbr.rel (0) target = $region9
    $region8: #{tpu_custom_call.1} parent=1 // pred_region
      _
    $region9: #{tpu_custom_call.1} parent=1 // pred_fallthru
      _
    // Predicated region
    $region10: #{tpu_custom_call.1} parent=1 // pred_check
      _
    $region11: #{tpu_custom_call.1} parent=1 // pred_check_branch
      %14 = sbr.rel (0) target = $region13
    $region12: #{tpu_custom_call.1} parent=1 // pred_region
      _
    $region13: #{tpu_custom_call.1} parent=1 // pred_fallthru
      _
    %v15 = vld [vmem:[%s0] sm:$0xff]
    %v16 = vld [vmem:[%s0 + $0x8] sm:$0xff]
    %v17 = vld [vmem:[%s0 + $0x10] sm:$0xff]
    %v18 = vld [vmem:[%s0 + $0x18] sm:$0xff]
    %v19 = vld [vmem:[%s0 + $0x20] sm:$0xff]
    %v20 = vld [vmem:[%s0 + $0x28] sm:$0xff]
    %v21 = vld [vmem:[%s1] sm:$0xff]
    %v22 = vld [vmem:[%s1 + $0x8] sm:$0xff]
    %v23 = vld [vmem:[%s1 + $0x10] sm:$0xff]
    %v24 = vld [vmem:[%s1 + $0x18] sm:$0xff]
    %v25 = vld [vmem:[%s1 + $0x20] sm:$0xff]
    %v26 = vld [vmem:[%s1 + $0x28] sm:$0xff]
    %v27 = vlaneseq
    %v28 = vand.u32 %v27, 127
    %29 = vset.pattern.permute.xlu0 0
    %30 = vperm.xlu0 %29, %v21
    %v31 = vpop.permute.xlu0 %30
    %32 = vset.pattern.permute.xlu0 0
    %33 = vperm.xlu0 %32, %v22
    %v34 = vpop.permute.xlu0 %33
    %35 = vset.pattern.permute.xlu0 0
    %36 = vperm.xlu0 %35, %v23
    %v37 = vpop.permute.xlu0 %36
    %38 = vset.pattern.permute.xlu0 0
    %39 = vperm.xlu0 %38, %v24
    %v40 = vpop.permute.xlu0 %39
    %41 = vset.pattern.permute.xlu0 0
    %42 = vperm.xlu0 %41, %v25
    %v43 = vpop.permute.xlu0 %42
    %44 = vset.pattern.permute.xlu0 0
    %45 = vperm.xlu0 %44, %v26
    %v46 = vpop.permute.xlu0 %45
    %vm47 = vcmp.eq.s32.totalorder %v28, %v31
    %vm48 = vcmp.eq.s32.totalorder %v28, %v34
    %vm49 = vcmp.eq.s32.totalorder %v28, %v37
    %vm50 = vcmp.eq.s32.totalorder %v28, %v40
    %vm51 = vcmp.eq.s32.totalorder %v28, %v43
    %vm52 = vcmp.eq.s32.totalorder %v28, %v46
    %v53 = vsel %vm47, 1, 0
    %v54 = vsel %vm48, 1, 0
    %v55 = vsel %vm49, 1, 0
    %v56 = vsel %vm50, 1, 0
    %v57 = vsel %vm51, 1, 0
    %v58 = vsel %vm52, 1, 0
    %v59 = vcvt.s32.f32 %v53
    %v60 = vcvt.s32.f32 %v54
    %v61 = vcvt.s32.f32 %v55
    %v62 = vcvt.s32.f32 %v56
    %v63 = vcvt.s32.f32 %v57
    %v64 = vcvt.s32.f32 %v58
    %vm65 = vcmask 130048
    %v66 = vsel %vm65, %v15, -inf
    %67 = vmax.xlane.f32.xlu0 %v66
    %v68 = vpop.xlane.xlu0 %67
    %v69 = vsel %vm65, %v16, -inf
    %70 = vmax.xlane.f32.xlu0 %v69
    %v71 = vpop.xlane.xlu0 %70
    %v72 = vsel %vm65, %v17, -inf
    %73 = vmax.xlane.f32.xlu0 %v72
    %v74 = vpop.xlane.xlu0 %73
    %v75 = vsel %vm65, %v18, -inf
    %76 = vmax.xlane.f32.xlu0 %v75
    %v77 = vpop.xlane.xlu0 %76
    %v78 = vsel %vm65, %v19, -inf
    %79 = vmax.xlane.f32.xlu0 %v78
    %v80 = vpop.xlane.xlu0 %79
    %v81 = vsel %vm65, %v20, -inf
    %82 = vmax.xlane.f32.xlu0 %v81
    %v83 = vpop.xlane.xlu0 %82
    %v84 = vsub.f32 %v15, %v68
    %v85 = vsub.f32 %v16, %v71
    %v86 = vsub.f32 %v17, %v74
    %v87 = vsub.f32 %v18, %v77
    %v88 = vsub.f32 %v19, %v80
    %v89 = vsub.f32 %v20, %v83
    %v90 = vmul.f32 %v84, 1.442695
    %v91 = vpow.pop %v90
    %v92 = vmul.f32 %v85, 1.442695
    %v93 = vpow.pop %v92
    %v94 = vmul.f32 %v86, 1.442695
    %v95 = vpow.pop %v94
    %v96 = vmul.f32 %v87, 1.442695
    %v97 = vpow.pop %v96
    %v98 = vmul.f32 %v88, 1.442695
    %v99 = vpow.pop %v98
    %v100 = vmul.f32 %v89, 1.442695
    %v101 = vpow.pop %v100
    %v102 = vsel %vm65, %v91, 0.0
    %103 = vadd.xlane.f32.xlu0 %v102
    %v104 = vpop.xlane.xlu0 %103
    %v105 = vsel %vm65, %v93, 0.0
    %106 = vadd.xlane.f32.xlu0 %v105
    %v107 = vpop.xlane.xlu0 %106
    %v108 = vsel %vm65, %v95, 0.0
    %109 = vadd.xlane.f32.xlu0 %v108
    %v110 = vpop.xlane.xlu0 %109
    %v111 = vsel %vm65, %v97, 0.0
    %112 = vadd.xlane.f32.xlu0 %v111
    %v113 = vpop.xlane.xlu0 %112
    %v114 = vsel %vm65, %v99, 0.0
    %115 = vadd.xlane.f32.xlu0 %v114
    %v116 = vpop.xlane.xlu0 %115
    %v117 = vsel %vm65, %v101, 0.0
    %118 = vadd.xlane.f32.xlu0 %v117
    %v119 = vpop.xlane.xlu0 %118
    %v120 = vlog2.pop %v104
    %v121 = vmul.f32 %v120, 0.6931472
    %v122 = vlog2.pop %v107
    %v123 = vmul.f32 %v122, 0.6931472
    %v124 = vlog2.pop %v110
    %v125 = vmul.f32 %v124, 0.6931472
    %v126 = vlog2.pop %v113
    %v127 = vmul.f32 %v126, 0.6931472
    %v128 = vlog2.pop %v116
    %v129 = vmul.f32 %v128, 0.6931472
    %v130 = vlog2.pop %v119
    %v131 = vmul.f32 %v130, 0.6931472
    %v132 = vadd.f32 %v68, %v121
    %v133 = vadd.f32 %v71, %v123
    %v134 = vadd.f32 %v74, %v125
    %v135 = vadd.f32 %v77, %v127
    %v136 = vadd.f32 %v80, %v129
    %v137 = vadd.f32 %v83, %v131
    %v138 = vmul.f32 %v15, %v59
    %v139 = vmul.f32 %v16, %v60
    %v140 = vmul.f32 %v17, %v61
    %v141 = vmul.f32 %v18, %v62
    %v142 = vmul.f32 %v19, %v63
    %v143 = vmul.f32 %v20, %v64
    %v144 = vsel %vm65, %v138, 0.0
    %145 = vadd.xlane.f32.xlu0 %v144
    %v146 = vpop.xlane.xlu0 %145
    %v147 = vsel %vm65, %v139, 0.0
    %148 = vadd.xlane.f32.xlu0 %v147
    %v149 = vpop.xlane.xlu0 %148
    %v150 = vsel %vm65, %v140, 0.0
    %151 = vadd.xlane.f32.xlu0 %v150
    %v152 = vpop.xlane.xlu0 %151
    %v153 = vsel %vm65, %v141, 0.0
    %154 = vadd.xlane.f32.xlu0 %v153
    %v155 = vpop.xlane.xlu0 %154
    %v156 = vsel %vm65, %v142, 0.0
    %157 = vadd.xlane.f32.xlu0 %v156
    %v158 = vpop.xlane.xlu0 %157
    %v159 = vsel %vm65, %v143, 0.0
    %160 = vadd.xlane.f32.xlu0 %v159
    %v161 = vpop.xlane.xlu0 %160
    %v162 = vsub.f32 %v132, %v146
    %v163 = vsub.f32 %v133, %v149
    %v164 = vsub.f32 %v134, %v152
    %v165 = vsub.f32 %v135, %v155
    %v166 = vsub.f32 %v136, %v158
    %v167 = vsub.f32 %v137, %v161
    %v168 = vsub.f32 0.0, %v162
    %v169 = vsub.f32 0.0, %v163
    %v170 = vsub.f32 0.0, %v164
    %v171 = vsub.f32 0.0, %v165
    %v172 = vsub.f32 0.0, %v166
    %v173 = vsub.f32 0.0, %v167
    %v174 = vmul.f32 %v168, 1.442695
    %v175 = vpow.pop %v174
    %v176 = vmul.f32 %v169, 1.442695
    %v177 = vpow.pop %v176
    %v178 = vmul.f32 %v170, 1.442695
    %v179 = vpow.pop %v178
    %v180 = vmul.f32 %v171, 1.442695
    %v181 = vpow.pop %v180
    %v182 = vmul.f32 %v172, 1.442695
    %v183 = vpow.pop %v182
    %v184 = vmul.f32 %v173, 1.442695
    %v185 = vpow.pop %v184
    %v186 = vsub.f32 1.0, %v175
    %v187 = vsub.f32 1.0, %v177
    %v188 = vsub.f32 1.0, %v179
    %v189 = vsub.f32 1.0, %v181
    %v190 = vsub.f32 1.0, %v183
    %v191 = vsub.f32 1.0, %v185
    %v192 = vmax.f32 %v186, 0.0
    %v193 = vmax.f32 %v187, 0.0
    %v194 = vmax.f32 %v188, 0.0
    %v195 = vmax.f32 %v189, 0.0
    %v196 = vmax.f32 %v190, 0.0
    %v197 = vmax.f32 %v191, 0.0
    %v198 = vmul.f32 %v192, %v192
    %v199 = vmul.f32 %v193, %v193
    %v200 = vmul.f32 %v194, %v194
    %v201 = vmul.f32 %v195, %v195
    %v202 = vmul.f32 %v196, %v196
    %v203 = vmul.f32 %v197, %v197
    %v204 = vmul.f32 %v198, %v162
    %v205 = vmul.f32 %v199, %v163
    %v206 = vmul.f32 %v200, %v164
    %v207 = vmul.f32 %v201, %v165
    %v208 = vmul.f32 %v202, %v166
    %v209 = vmul.f32 %v203, %v167
    %v210 = vld [vmem:[%s2] sm:$0x1]
    %v212 = vlaneseq
    %v213 = vshrl.u32 %v212, 7
    %v214 = vsub.s32 0, %v213
    %v215 = vrot.slane %v210, %v214
    %v217 = vmul.f32 %v215, %v59
    %v218 = vmul.f32 %v215, %v60
    %v219 = vmul.f32 %v215, %v61
    %v220 = vmul.f32 %v215, %v62
    %v221 = vmul.f32 %v215, %v63
    %v222 = vmul.f32 %v215, %v64
    %v223 = vsel %vm65, %v217, 0.0
    %224 = vadd.xlane.f32.xlu0 %v223
    %v225 = vpop.xlane.xlu0 %224
    %v226 = vsel %vm65, %v218, 0.0
    %227 = vadd.xlane.f32.xlu0 %v226
    %v228 = vpop.xlane.xlu0 %227
    %v229 = vsel %vm65, %v219, 0.0
    %230 = vadd.xlane.f32.xlu0 %v229
    %v231 = vpop.xlane.xlu0 %230
    %v232 = vsel %vm65, %v220, 0.0
    %233 = vadd.xlane.f32.xlu0 %v232
    %v234 = vpop.xlane.xlu0 %233
    %v235 = vsel %vm65, %v221, 0.0
    %236 = vadd.xlane.f32.xlu0 %v235
    %v237 = vpop.xlane.xlu0 %236
    %v238 = vsel %vm65, %v222, 0.0
    %239 = vadd.xlane.f32.xlu0 %v238
    %v240 = vpop.xlane.xlu0 %239
    %v241 = vmul.f32 %v225, %v204
    %v242 = vmul.f32 %v228, %v205
    %v243 = vmul.f32 %v231, %v206
    %v244 = vmul.f32 %v234, %v207
    %v245 = vmul.f32 %v237, %v208
    %v246 = vmul.f32 %v240, %v209
    %v247 = vlaneseq
    %v248 = vshrl.u32 %v247, 7
    %v249 = vadd.s32 %v248, 8
    %v250 = vadd.s32 %v248, 16
    %v251 = vadd.s32 %v248, 24
    %v252 = vadd.s32 %v248, 32
    %v253 = vadd.s32 %v248, 40
    %s254 = smul.u32 0, 48
    %v255 = vstv %s254
    %v256 = vadd.s32 %v248, %v255
    %v257 = vadd.s32 %v249, %v255
    %v258 = vadd.s32 %v250, %v255
    %v259 = vadd.s32 %v251, %v255
    %v260 = vadd.s32 %v252, %v255
    %v261 = vadd.s32 %v253, %v255
    %vm262 = vcmp.lt.s32.totalorder %v256, 37
    %vm263 = vcmp.lt.s32.totalorder %v257, 37
    %vm264 = vcmp.lt.s32.totalorder %v258, 37
    %vm265 = vcmp.lt.s32.totalorder %v259, 37
    %vm266 = vcmp.lt.s32.totalorder %v260, 37
    %vm267 = vcmp.lt.s32.totalorder %v261, 37
    %v268 = vsel %vm262, %v241, 0.0
    %v269 = vsel %vm263, %v242, 0.0
    %v270 = vsel %vm264, %v243, 0.0
    %v271 = vsel %vm265, %v244, 0.0
    %v272 = vsel %vm266, %v245, 0.0
    %v273 = vsel %vm267, %v246, 0.0
    %vm274 = vcmask 7168
    %v275 = vsel %vm274, %v268, 0.0
    %v276 = vsel %vm274, %v269, 0.0
    %v277 = vadd.f32 %v275, %v276
    %v278 = vsel %vm274, %v270, 0.0
    %v279 = vadd.f32 %v277, %v278
    %v280 = vsel %vm274, %v271, 0.0
    %v281 = vadd.f32 %v279, %v280
    %v282 = vsel %vm274, %v272, 0.0
    %v283 = vadd.f32 %v281, %v282
    %v284 = vsel %vm274, %v273, 0.0
    %v285 = vadd.f32 %v283, %v284
    %286 = vadd.xlane.f32.xlu0 %v285
    %v287 = vpop.xlane.xlu0 %286
    %v288 = vrot.slane %v287, 4
    %v289 = vadd.f32 %v287, %v288
    %v290 = vrot.slane %v289, 2
    %v291 = vadd.f32 %v289, %v290
    %v292 = vrot.slane %v291, 1
    %v293 = vadd.f32 %v291, %v292
    %s294 = vtos %v293
    %v295 = vstv %s294
    %296 = vst [vmem:[#allocation2] sm:$0xff] %v295
    // Predicated region
    $region14: #{tpu_custom_call.1} parent=1 // pred_check
      _
    $region15: #{tpu_custom_call.1} parent=1 // pred_check_branch
      %298 = sbr.rel (0) target = $region17
    $region16: #{tpu_custom_call.1} parent=1 // pred_region
      %s300 = ssub.s32 128, 128
      %301 = vsyncadd [#allocation3], %s300
      %s303 = sshll.u32 [#allocation2], 4
      %s304 = int_to_ptr.vmem [resolvable:$true] %s303
      %306 = dma.vmem_to_hbm [thread:$0]  %s304, 128, %s3, [#allocation3]
    $region17: #{tpu_custom_call.1} parent=1 // pred_fallthru
      _
    // Predicated region
    $region18: #{tpu_custom_call.1} parent=1 // pred_check
      _
    $region19: #{tpu_custom_call.1} parent=1 // pred_check_branch
      %308 = sbr.rel (0) target = $region21
    $region20: #{tpu_custom_call.1} parent=1 // pred_region
      %309 = dma.done [#allocation3], 128
    $region21: #{tpu_custom_call.1} parent=1 // pred_fallthru
      _
    %310 = vsyncpa [#allocation3], 1

</llo_original>
